<compile_context>
chip_gen: v7x
topology: tpu7x:2x2x1
jax: 0.10.0
libtpu: 0.0.40
codegen_flags: <defaults>
</compile_context>

<pallas_src>
import jax
import jax.numpy as jnp
from jax.experimental import pallas as pl
from jax.experimental.pallas import tpu as pltpu


_LANE = 128
_BLOCK_BUDGET_BYTES = 8 * 1024 * 1024    # per-block slab (review: v7x sweet spot)
_VMEM_LIMIT_BYTES = 48 * 1024 * 1024     # 2x(in)+2x(out) blocks + constant + scratch
_SMALL_INPUT_BYTES = 1 * 1024 * 1024     # below this, plain XLA fusion wins
_MEGACORE_SPLIT_BYTES = 2 * 1024 * 1024  # force >=2 grid steps above this (v7x 2 TCs)


def _div_kernel(x_ref, c_ref, o_ref):
    # x_ref: (ROWS, L) tile of the input.
    # c_ref: (1, L) resident divisor tile; broadcasts across sublanes.
    # Math in f32 regardless of storage dtype; only the output is cast.
    x = x_ref[...].astype(jnp.float32)
    c = c_ref[...].astype(jnp.float32)
    o_ref[...] = (x / c).astype(o_ref.dtype)


def div_by_constant(x, constant, *, force_pallas=False):
    """x: (N, C, H, W); constant: (H, W) -> (N, C, H, W), x / constant."""
    N, C, H, W = x.shape
    assert constant.shape == (H, W)

    itemsize = jnp.dtype(x.dtype).itemsize

    # Tiny-input fast path: at a few KiB the pallas_call launch + pipeline
    # prologue dominate by orders of magnitude; let XLA fuse the divide.
    if not force_pallas and x.size * itemsize < _SMALL_INPUT_BYTES:
        out = x.astype(jnp.float32) / constant[None, None, :, :].astype(jnp.float32)
        return out.astype(x.dtype)

    R = N * C          # rows streamed through the kernel
    L = H * W          # lane-dense minor dim

    x2 = x.reshape(R, L)
    c2 = constant.reshape(1, L).astype(jnp.float32)

    # Keep the output lane dim a multiple of 128 (unmasked vst). Pad the
    # divisor with 1.0 so padded lanes stay finite (0/1 = 0) and slice later.
    L_pad = ((L + _LANE - 1) // _LANE) * _LANE
    if L_pad != L:
        x2 = jnp.pad(x2, ((0, 0), (0, L_pad - L)))
        c2 = jnp.pad(c2, ((0, 0), (0, L_pad - L)), constant_values=1.0)

    # Row-block sizing: as large as the per-block budget allows, aligned to
    # the dtype's sublane packing (8 for f32, 16 for bf16, 32 for int8/fp8).
    sublane = {4: 8, 2: 16, 1: 32}.get(itemsize, 8)
    row_bytes = L_pad * itemsize
    max_rows = max(sublane, (_BLOCK_BUDGET_BYTES // row_bytes) // sublane * sublane)

    # Megacore: inputs big enough to care get >= 2 grid steps so the
    # "parallel" axis shards across v7x's 2 TensorCores (no-op on v5e/v6e).
    total_bytes = R * row_bytes
    if total_bytes > _MEGACORE_SPLIT_BYTES and R >= 2 * sublane:
        half_rows = ((R + 1) // 2 + sublane - 1) // sublane * sublane
        max_rows = min(max_rows, half_rows)

    row_block = R if R <= max_rows else max_rows
    grid = (pl.cdiv(R, row_block),)

    out = pl.pallas_call(
        _div_kernel,
        out_shape=jax.ShapeDtypeStruct((R, L_pad), x.dtype),
        grid_spec=pltpu.PrefetchScalarGridSpec(
            num_scalar_prefetch=0,
            grid=grid,
            in_specs=[
                # Large lane-dense slab of x per grid step.
                pl.BlockSpec((row_block, L_pad), lambda i: (i, 0)),
                # Divisor: same block every step -> stays resident in VMEM.
                pl.BlockSpec((1, L_pad), lambda i: (0, 0)),
            ],
            out_specs=pl.BlockSpec((row_block, L_pad), lambda i: (i, 0)),
        ),
        compiler_params=pltpu.CompilerParams(
            # Shards across v7x's 2 TensorCores whenever the grid has >1 step.
            dimension_semantics=("parallel",),
            # Explicit limit so the double-buffered pipeline never trips the
            # per-chip scoped-VMEM defaults (16/32/32 MiB).
            vmem_limit_bytes=_VMEM_LIMIT_BYTES,
        ),
    )(x2, c2)

    if L_pad != L:
        out = out[:, :L]
    return out.reshape(N, C, H, W)


if __name__ == "__main__":
    # Small shapes consistent with the module: x = (2, 4, 16, 16), constant = (16, 16).
    N, C, H, W = 2, 4, 16, 16

    key = jax.random.PRNGKey(0)
    x = jax.random.normal(key, (N, C, H, W), dtype=jnp.float32)

    # The PyTorch module's constant is zero-initialized (-> inf/nan output);
    # use a deterministic nonzero fill of the same shape for a meaningful check.
    constant = (jnp.arange(H * W, dtype=jnp.float32).reshape(H, W) + 1.0) / 32.0

    # Exercise the Pallas kernel itself (the default path would route this
    # tiny input to the XLA fast path).
    out = div_by_constant(x, constant, force_pallas=True)
    jax.block_until_ready(out)

    ref = x / constant[None, None, :, :]
    assert out.shape == (N, C, H, W)
    assert jnp.allclose(out, ref, rtol=1e-6, atol=1e-6)

    # The small-input fast path must agree as well.
    out_fast = div_by_constant(x, constant)
    jax.block_until_ready(out_fast)
    assert jnp.allclose(out_fast, ref, rtol=1e-6, atol=1e-6)

    print("KERNEL_OK")
</pallas_src>

<mosaic_0001>
module attributes {stable_mosaic.version = 11 : i64} {
  func.func @_div_kernel(%arg0: i32, %arg1: memref<8x256xf32, #tpu.memory_space<vmem>>, %arg2: memref<1x256xf32, #tpu.memory_space<vmem>>, %arg3: memref<8x256xf32, #tpu.memory_space<vmem>>) attributes {dimension_semantics = [#tpu.dimension_semantics<parallel>], iteration_bounds = array<i64: 1>, scalar_prefetch = 0 : i64, scratch_operands = 0 : i64, tpu.core_type = #tpu.core_type<tc>, window_params = [{transform_indices = @transform_0, window_bounds = array<i64: 8, 256>}, {pipeline_mode = #tpu.pipeline_mode<synchronous>, transform_indices = @transform_1, window_bounds = array<i64: 1, 256>}, {transform_indices = @transform_2, window_bounds = array<i64: 8, 256>}]} {
    %c0 = arith.constant 0 : index
    %c0_0 = arith.constant 0 : index
    %0 = vector.load %arg1[%c0, %c0_0] : memref<8x256xf32, #tpu.memory_space<vmem>>, vector<8x256xf32>
    %c0_1 = arith.constant 0 : index
    %c0_2 = arith.constant 0 : index
    %1 = vector.load %arg2[%c0_1, %c0_2] : memref<1x256xf32, #tpu.memory_space<vmem>>, vector<1x256xf32>
    %2 = vector.broadcast %1 : vector<1x256xf32> to vector<8x256xf32>
    %3 = arith.divf %0, %2 : vector<8x256xf32>
    %c0_3 = arith.constant 0 : index
    %c0_4 = arith.constant 0 : index
    %4 = vector.load %arg3[%c0_3, %c0_4] : memref<8x256xf32, #tpu.memory_space<vmem>>, vector<8x256xf32>
    tpu.vector_store %arg3[%c0_3, %c0_4], %3 {strides = array<i32>} : memref<8x256xf32, #tpu.memory_space<vmem>>, vector<8x256xf32>,
    return
  }
  func.func @transform_0(%arg0: i32) -> (i32, i32) {
    %c0_i32 = arith.constant 0 : i32
    %c0_i32_0 = arith.constant 0 : i32
    return %arg0, %c0_i32 : i32, i32
  }
  func.func @transform_1(%arg0: i32) -> (i32, i32) {
    %c0_i32 = arith.constant 0 : i32
    %c0_i32_0 = arith.constant 0 : i32
    %c0_i32_1 = arith.constant 0 : i32
    return %c0_i32, %c0_i32_0 : i32, i32
  }
  func.func @transform_2(%arg0: i32) -> (i32, i32) {
    %c0_i32 = arith.constant 0 : i32
    %c0_i32_0 = arith.constant 0 : i32
    return %arg0, %c0_i32 : i32, i32
  }
}

</mosaic_0001>

<llo_original>
// kernel: tpu_custom_call.1
$region0: #{tpu_custom_call.1}
  #allocation0 [shape = 'u32[]', space=smem, size = 0x4, offset = 0x4, fixed_abs, tag = 'smem constant byte address 0x4 - core index']
  #allocation1 [shape = 'u32[144,128]{1,0:T(1,128)}', space=vmem, size = 0x12000, scoped, tag = 'internal scratch']
  %s0 = inlined_call_operand.hbm [shape: f32[8,256], index: 0, kind: input, shape index: {}]
  %s1 = inlined_call_operand.vmem [shape: f32[1,256], index: 1, kind: input, shape index: {}]
  %s2 = inlined_call_operand.hbm [shape: f32[8,256], index: 2, kind: output, shape index: {}]
  %s3 = sld [smem:[#allocation0]]
  $region22: #{tpu_custom_call.1} parent=0
    _
  %s5 = ssub.s32 1, %s3
  %s6 = scalar_select 0, %s5, %s3
  $region1: #{tpu_custom_call.1} parent=0
    #allocation2 [shape = 'u8[8192]{0}', space=vmem, size = 0x2000, scoped, tag = 'input window, operand 0, single buffered']
    #allocation3 [shape = 's32[1]{0}', space=sflag, size = 0x4, scoped, tag = 'scoped memory for tpu_custom_call.1']
    #allocation4 [shape = 's32[1]{0}', space=sflag, size = 0x4, scoped, tag = 'scoped memory for tpu_custom_call.1']
    #allocation5 [shape = 'u8[8192]{0}', space=vmem, size = 0x2000, scoped, tag = 'output window, operand 0, single buffered']
    %7 = vsyncpa [#allocation3], 0
    %8 = vsyncpa [#allocation4], 0
    // Predicated region
    $region2: #{tpu_custom_call.1} parent=1 // pred_check
      _
    $region3: #{tpu_custom_call.1} parent=1 // pred_check_branch
      %10 = sbr.rel (0) target = $region5
    $region4: #{tpu_custom_call.1} parent=1 // pred_region
      %s12 = ssub.s32 256, 256
      %13 = vsyncadd [#allocation3], %s12
      %s15 = sshll.u32 [#allocation2], 4
      %s16 = int_to_ptr.vmem [resolvable:$true] %s15
      %18 = dma.hbm_to_vmem [thread:$0]  %s0, 256, %s16, [#allocation3]
    $region5: #{tpu_custom_call.1} parent=1 // pred_fallthru
      _
    // Predicated region
    $region6: #{tpu_custom_call.1} parent=1 // pred_check
      _
    $region7: #{tpu_custom_call.1} parent=1 // pred_check_branch
      %20 = sbr.rel (0) target = $region9
    $region8: #{tpu_custom_call.1} parent=1 // pred_region
      _
    $region9: #{tpu_custom_call.1} parent=1 // pred_fallthru
      _
    // Predicated region
    $region10: #{tpu_custom_call.1} parent=1 // pred_check
      _
    $region11: #{tpu_custom_call.1} parent=1 // pred_check_branch
      %22 = sbr.rel (0) target = $region13
    $region12: #{tpu_custom_call.1} parent=1 // pred_region
      %23 = dma.done [#allocation3], 256
    $region13: #{tpu_custom_call.1} parent=1 // pred_fallthru
      _
    %v24 = vld [vmem:[#allocation2] sm:$0xff]
    %v25 = vld [vmem:[#allocation2 + $0x8] sm:$0xff]
    %v26 = vld [vmem:[%s1] sm:$0x3]
    %v28 = vlaneseq
    %v29 = vshrl.u32 %v28, 7
    %v30 = vsub.s32 0, %v29
    %v31 = vrot.slane %v26, %v30
    %v32 = vlaneseq
    %v33 = vshrl.u32 %v32, 7
    %v34 = vsub.s32 1, %v33
    %v35 = vrot.slane %v26, %v34
    %v38 = vrcp.pop %v31
    %v39 = vmul.f32 %v24, %v38
    %v40 = vrcp.pop %v35
    %v41 = vmul.f32 %v25, %v40
    %42 = vst [vmem:[#allocation5] sm:$0xff] %v39
    %43 = vst [vmem:[#allocation5 + $0x8] sm:$0xff] %v41
    // Predicated region
    $region14: #{tpu_custom_call.1} parent=1 // pred_check
      _
    $region15: #{tpu_custom_call.1} parent=1 // pred_check_branch
      %45 = sbr.rel (0) target = $region17
    $region16: #{tpu_custom_call.1} parent=1 // pred_region
      %s47 = ssub.s32 256, 256
      %48 = vsyncadd [#allocation4], %s47
      %s50 = sshll.u32 [#allocation5], 4
      %s51 = int_to_ptr.vmem [resolvable:$true] %s50
      %53 = dma.vmem_to_hbm [thread:$0]  %s51, 256, %s2, [#allocation4]
    $region17: #{tpu_custom_call.1} parent=1 // pred_fallthru
      _
    // Predicated region
    $region18: #{tpu_custom_call.1} parent=1 // pred_check
      _
    $region19: #{tpu_custom_call.1} parent=1 // pred_check_branch
      %55 = sbr.rel (0) target = $region21
    $region20: #{tpu_custom_call.1} parent=1 // pred_region
      %56 = dma.done [#allocation4], 256
    $region21: #{tpu_custom_call.1} parent=1 // pred_fallthru
      _
    %57 = vsyncpa [#allocation3], 1
    %58 = vsyncpa [#allocation4], 1

</llo_original>
